<compile_context>
chip_gen: v5e
topology: v5e:2x2
jax: 0.10.0
libtpu: 0.0.40
codegen_flags: <defaults>
</compile_context>

<pallas_src>
import functools

import jax
import jax.numpy as jnp
from jax.experimental import pallas as pl
from jax.experimental.pallas import tpu as pltpu


def _pick_tile(dim, preferred, align):
    """Largest tile <= preferred that divides `dim` and is a multiple of
    `align`; falls back to the full extent (always a legal block shape)."""
    t = min(preferred, dim)
    t = (t // align) * align
    while t >= align:
        if dim % t == 0:
            return t
        t -= align
    return dim


def _matmul_kernel(a_ref, b_ref, o_ref, acc_ref):
    @pl.when(pl.program_id(2) == 0)
    def _():
        acc_ref[...] = jnp.zeros_like(acc_ref)

    acc_ref[...] += jnp.dot(a_ref[...], b_ref[...],
                            preferred_element_type=jnp.float32)

    @pl.when(pl.program_id(2) == pl.num_programs(2) - 1)
    def _():
        o_ref[...] = acc_ref[...].astype(o_ref.dtype)


def _matmul_bias_act_kernel(a_ref, b_ref, bias_ref, o_ref, acc_ref, *,
                            apply_act, negative_slope):
    @pl.when(pl.program_id(2) == 0)
    def _():
        acc_ref[...] = jnp.zeros_like(acc_ref)

    acc_ref[...] += jnp.dot(a_ref[...], b_ref[...],
                            preferred_element_type=jnp.float32)

    @pl.when(pl.program_id(2) == pl.num_programs(2) - 1)
    def _():
        res = acc_ref[...] + bias_ref[...].astype(jnp.float32)
        if apply_act:
            res = jnp.where(res > 0, res, negative_slope * res)
        o_ref[...] = res.astype(o_ref.dtype)


def _grid_and_specs(M, K, N, tm, tk, tn):
    grid = (M // tm, N // tn, K // tk)
    a_spec = pl.BlockSpec((tm, tk), lambda i, j, k: (i, k))
    b_spec = pl.BlockSpec((tk, tn), lambda i, j, k: (k, j))
    o_spec = pl.BlockSpec((tm, tn), lambda i, j, k: (i, j))
    return grid, a_spec, b_spec, o_spec


def matmul(a, b, *, tm=256, tn=256, tk=512):
    """C = A @ B, tiled MXU matmul with f32 accumulation."""
    M, K = a.shape
    K2, N = b.shape
    assert K == K2
    tm = _pick_tile(M, tm, 8)
    tn = _pick_tile(N, tn, 128)
    tk = _pick_tile(K, tk, 128)
    grid, a_spec, b_spec, o_spec = _grid_and_specs(M, K, N, tm, tk, tn)
    return pl.pallas_call(
        _matmul_kernel,
        out_shape=jax.ShapeDtypeStruct((M, N), a.dtype),
        grid_spec=pltpu.PrefetchScalarGridSpec(
            num_scalar_prefetch=0,
            grid=grid,
            in_specs=[a_spec, b_spec],
            out_specs=o_spec,
            scratch_shapes=[pltpu.VMEM((tm, tn), jnp.float32)],
        ),
        compiler_params=pltpu.CompilerParams(
            dimension_semantics=("parallel", "parallel", "arbitrary")),
    )(a, b)


def matmul_bias_act(a, b, bias, *, apply_act, negative_slope=0.2,
                    tm=256, tn=256, tk=512):
    """C = A @ B + bias, optionally LeakyReLU, fused into the epilogue."""
    M, K = a.shape
    K2, N = b.shape
    assert K == K2
    bias2d = bias.reshape(1, N)
    tm = _pick_tile(M, tm, 8)
    tn = _pick_tile(N, tn, 128)
    tk = _pick_tile(K, tk, 128)
    grid, a_spec, b_spec, o_spec = _grid_and_specs(M, K, N, tm, tk, tn)
    bias_spec = pl.BlockSpec((1, tn), lambda i, j, k: (0, j))
    kernel = functools.partial(_matmul_bias_act_kernel,
                               apply_act=apply_act,
                               negative_slope=negative_slope)
    return pl.pallas_call(
        kernel,
        out_shape=jax.ShapeDtypeStruct((M, N), a.dtype),
        grid_spec=pltpu.PrefetchScalarGridSpec(
            num_scalar_prefetch=0,
            grid=grid,
            in_specs=[a_spec, b_spec, bias_spec],
            out_specs=o_spec,
            scratch_shapes=[pltpu.VMEM((tm, tn), jnp.float32)],
        ),
        compiler_params=pltpu.CompilerParams(
            dimension_semantics=("parallel", "parallel", "arbitrary")),
    )(a, b, bias2d)


def gcn_forward(x, adj, weights, biases, *, negative_slope=0.2):
    """Pallas equivalent of GCN.forward(x, adj) in eval mode."""
    n_layers = len(weights)
    h = x
    for i in range(n_layers):
        support = matmul(h, weights[i])                       # x @ W
        h = matmul_bias_act(adj, support, biases[i],          # adj @ support + b
                            apply_act=(i < n_layers - 1),
                            negative_slope=negative_slope)
        # TODO(synk): F.dropout before the last layer is the eval-mode identity
        # here; training-mode dropout would use pltpu.prng_seed/prng_random_bits.
    return h


if __name__ == "__main__":
    num_nodes = 64
    ninput = 32
    nhid = [64]
    noutput = 16
    negative_slope = 0.2

    channels = [ninput] + nhid + [noutput]
    key = jax.random.PRNGKey(0)
    keys = jax.random.split(key, 2 * (len(channels) - 1) + 2)

    # GraphConvolution.reset_parameters: uniform(-stdv, stdv), stdv = 1/sqrt(out)
    weights, biases = [], []
    for i in range(len(channels) - 1):
        fan_in, fan_out = channels[i], channels[i + 1]
        stdv = 1.0 / (fan_out ** 0.5)
        w = jax.random.uniform(keys[2 * i], (fan_in, fan_out),
                               jnp.float32, -stdv, stdv)
        b = jax.random.uniform(keys[2 * i + 1], (fan_out,),
                               jnp.float32, -stdv, stdv)
        weights.append(w)
        biases.append(b)

    kx, kadj = keys[-2], keys[-1]
    x = jax.random.normal(kx, (num_nodes, ninput), dtype=jnp.float32)

    # dense row-normalized adjacency with self-loops (spmm -> dense mm here)
    a = (jax.random.uniform(kadj, (num_nodes, num_nodes)) < 0.2).astype(jnp.float32)
    a = jnp.minimum(a + jnp.eye(num_nodes, dtype=jnp.float32), 1.0)
    adj = a / a.sum(axis=1, keepdims=True)

    out = gcn_forward(x, adj, weights, biases, negative_slope=negative_slope)
    out = jax.block_until_ready(out)

    # plain-JAX reference
    h = x
    for i in range(len(weights)):
        o = adj @ (h @ weights[i]) + biases[i]
        if i < len(weights) - 1:
            o = jnp.where(o > 0, o, negative_slope * o)
        h = o
    ref = h

    assert out.shape == (num_nodes, noutput)
    assert jnp.allclose(out, ref, atol=1e-3, rtol=1e-3), "GCN Pallas mismatch"
    print("KERNEL_OK")
</pallas_src>

<mosaic_0001>
module attributes {stable_mosaic.version = 11 : i64} {
  func.func @_matmul_kernel(%arg0: i32, %arg1: i32, %arg2: i32, %arg3: memref<64x32xf32, #tpu.memory_space<vmem>>, %arg4: memref<32x64xf32, #tpu.memory_space<vmem>>, %arg5: memref<64x64xf32, #tpu.memory_space<vmem>>, %arg6: memref<64x64xf32, #tpu.memory_space<vmem>>) attributes {dimension_semantics = [#tpu.dimension_semantics<parallel>, #tpu.dimension_semantics<parallel>, #tpu.dimension_semantics<arbitrary>], iteration_bounds = array<i64: 1, 1, 1>, scalar_prefetch = 0 : i64, scratch_operands = 1 : i64, tpu.core_type = #tpu.core_type<tc>, window_params = [{transform_indices = @transform_0, window_bounds = array<i64: 64, 32>}, {transform_indices = @transform_1, window_bounds = array<i64: 32, 64>}, {transform_indices = @transform_2, window_bounds = array<i64: 64, 64>}]} {
    %c0_i32 = arith.constant 0 : i32
    %0 = arith.cmpi eq, %arg2, %c0_i32 : i32
    %1 = arith.extui %0 : i1 to i32
    %c0_i32_0 = arith.constant 0 : i32
    %2 = arith.cmpi ne, %1, %c0_i32_0 : i32
    scf.if %2 {
      %cst_10 = arith.constant 0.000000e+00 : f32
      %12 = vector.broadcast %cst_10 : f32 to vector<64x64xf32>
      %c0_11 = arith.constant 0 : index
      %c0_12 = arith.constant 0 : index
      %13 = vector.load %arg6[%c0_11, %c0_12] : memref<64x64xf32, #tpu.memory_space<vmem>>, vector<64x64xf32>
      tpu.vector_store %arg6[%c0_11, %c0_12], %12 {strides = array<i32>} : memref<64x64xf32, #tpu.memory_space<vmem>>, vector<64x64xf32>,
    } else {
    }
    %c0 = arith.constant 0 : index
    %c0_1 = arith.constant 0 : index
    %3 = vector.load %arg6[%c0, %c0_1] : memref<64x64xf32, #tpu.memory_space<vmem>>, vector<64x64xf32>
    %c0_2 = arith.constant 0 : index
    %c0_3 = arith.constant 0 : index
    %4 = vector.load %arg3[%c0_2, %c0_3] : memref<64x32xf32, #tpu.memory_space<vmem>>, vector<64x32xf32>
    %c0_4 = arith.constant 0 : index
    %c0_5 = arith.constant 0 : index
    %5 = vector.load %arg4[%c0_4, %c0_5] : memref<32x64xf32, #tpu.memory_space<vmem>>, vector<32x64xf32>
    %cst = arith.constant dense<0.000000e+00> : vector<64x64xf32>
    %6 = tpu.matmul %4, %5, %cst {dimension_numbers = #tpu.dot_dimension_numbers<[1], [0], [0], [1], [0, 0, 1, 1], [], []>} : vector<64x32xf32>, vector<32x64xf32>, vector<64x64xf32> -> vector<64x64xf32>
    %7 = arith.addf %3, %6 : vector<64x64xf32>
    %c0_6 = arith.constant 0 : index
    %c0_7 = arith.constant 0 : index
    %8 = vector.load %arg6[%c0_6, %c0_7] : memref<64x64xf32, #tpu.memory_space<vmem>>, vector<64x64xf32>
    tpu.vector_store %arg6[%c0_6, %c0_7], %7 {strides = array<i32>} : memref<64x64xf32, #tpu.memory_space<vmem>>, vector<64x64xf32>,
    %c0_i32_8 = arith.constant 0 : i32
    %9 = arith.cmpi eq, %arg2, %c0_i32_8 : i32
    %10 = arith.extui %9 : i1 to i32
    %c0_i32_9 = arith.constant 0 : i32
    %11 = arith.cmpi ne, %10, %c0_i32_9 : i32
    scf.if %11 {
      %c0_10 = arith.constant 0 : index
      %c0_11 = arith.constant 0 : index
      %12 = vector.load %arg6[%c0_10, %c0_11] : memref<64x64xf32, #tpu.memory_space<vmem>>, vector<64x64xf32>
      %c0_12 = arith.constant 0 : index
      %c0_13 = arith.constant 0 : index
      %13 = vector.load %arg5[%c0_12, %c0_13] : memref<64x64xf32, #tpu.memory_space<vmem>>, vector<64x64xf32>
      tpu.vector_store %arg5[%c0_12, %c0_13], %12 {strides = array<i32>} : memref<64x64xf32, #tpu.memory_space<vmem>>, vector<64x64xf32>,
    } else {
    }
    return
  }
  func.func @transform_0(%arg0: i32, %arg1: i32, %arg2: i32) -> (i32, i32) {
    %c0_i32 = arith.constant 0 : i32
    return %arg0, %arg2 : i32, i32
  }
  func.func @transform_1(%arg0: i32, %arg1: i32, %arg2: i32) -> (i32, i32) {
    %c0_i32 = arith.constant 0 : i32
    return %arg2, %arg1 : i32, i32
  }
  func.func @transform_2(%arg0: i32, %arg1: i32, %arg2: i32) -> (i32, i32) {
    %c0_i32 = arith.constant 0 : i32
    return %arg0, %arg1 : i32, i32
  }
}

</mosaic_0001>

<llo_original>
// kernel: tpu_custom_call.1
$region0: #{tpu_custom_call.1}
  #allocation0 [shape = 'u32[]', space=smem, size = 0x4, offset = 0x4, fixed_abs, tag = 'smem constant byte address 0x4 - core index']
  #allocation1 [shape = 'u32[72,128]{1,0:T(1,128)}', space=vmem, size = 0x9000, scoped, tag = 'internal scratch']
  #allocation2 [shape = 'f32[64,64]{1,0:T(8,128)}', space=vmem, size = 0x8000, scoped, tag = 'scratch operand']
  %s0 = inlined_call_operand.vmem [shape: f32[64,32], index: 0, kind: input, shape index: {}]
  %s1 = inlined_call_operand.vmem [shape: f32[32,64], index: 1, kind: input, shape index: {}]
  %s2 = inlined_call_operand.hbm [shape: f32[64,64], index: 2, kind: output, shape index: {}]
  %s3 = sld [smem:[#allocation0]]
  $region26: #{tpu_custom_call.1} parent=0
    _
  %s5 = ssub.s32 1, %s3
  %s6 = scalar_select 0, %s5, %s3
  $region1: #{tpu_custom_call.1} parent=0
    #allocation3 [shape = 'u8[32768]{0}', space=vmem, size = 0x8000, scoped, tag = 'output window, operand 0, single buffered']
    #allocation4 [shape = 's32[1]{0}', space=sflag, size = 0x4, scoped, tag = 'scoped memory for tpu_custom_call.1']
    %7 = vsyncpa [#allocation4], 0
    // Predicated region
    $region2: #{tpu_custom_call.1} parent=1 // pred_check
      _
    $region3: #{tpu_custom_call.1} parent=1 // pred_check_branch
      %9 = sbr.rel (0) target = $region5
    $region4: #{tpu_custom_call.1} parent=1 // pred_region
      _
    $region5: #{tpu_custom_call.1} parent=1 // pred_fallthru
      _
    // Predicated region
    $region6: #{tpu_custom_call.1} parent=1 // pred_check
      _
    $region7: #{tpu_custom_call.1} parent=1 // pred_check_branch
      %11 = sbr.rel (0) target = $region9
    $region8: #{tpu_custom_call.1} parent=1 // pred_region
      _
    $region9: #{tpu_custom_call.1} parent=1 // pred_fallthru
      _
    %p12 = scmp.eq.s32.totalorder 0, 0
    // Predicated region
    $region10: #{tpu_custom_call.1} parent=1 // pred_check
      %p13 = pneg %p12
    $region11: #{tpu_custom_call.1} parent=1 // pred_check_branch
      %15 = sbr.rel (%p13) target = $region13
    $region12: #{tpu_custom_call.1} parent=1 // pred_region
      %vm16 = vcmask 523264
      %17 = vst.msk [vmem:[#allocation2] sm:$0xff] %vm16, 0.0
      %18 = vst.msk [vmem:[#allocation2 + $0x8] sm:$0xff] %vm16, 0.0
      %19 = vst.msk [vmem:[#allocation2 + $0x10] sm:$0xff] %vm16, 0.0
      %20 = vst.msk [vmem:[#allocation2 + $0x18] sm:$0xff] %vm16, 0.0
      %21 = vst.msk [vmem:[#allocation2 + $0x20] sm:$0xff] %vm16, 0.0
      %22 = vst.msk [vmem:[#allocation2 + $0x28] sm:$0xff] %vm16, 0.0
      %23 = vst.msk [vmem:[#allocation2 + $0x30] sm:$0xff] %vm16, 0.0
      %24 = vst.msk [vmem:[#allocation2 + $0x38] sm:$0xff] %vm16, 0.0
    $region13: #{tpu_custom_call.1} parent=1 // pred_fallthru
      _
    %v25 = vld [vmem:[#allocation2] sm:$0xff]
    %v26 = vld [vmem:[#allocation2 + $0x8] sm:$0xff]
    %v27 = vld [vmem:[#allocation2 + $0x10] sm:$0xff]
    %v28 = vld [vmem:[#allocation2 + $0x18] sm:$0xff]
    %v29 = vld [vmem:[#allocation2 + $0x20] sm:$0xff]
    %v30 = vld [vmem:[#allocation2 + $0x28] sm:$0xff]
    %v31 = vld [vmem:[#allocation2 + $0x30] sm:$0xff]
    %v32 = vld [vmem:[#allocation2 + $0x38] sm:$0xff]
    %v33 = vld [vmem:[%s0] sm:$0xff]
    %v34 = vld [vmem:[%s0 + $0x8] sm:$0xff]
    %v35 = vld [vmem:[%s0 + $0x10] sm:$0xff]
    %v36 = vld [vmem:[%s0 + $0x18] sm:$0xff]
    %v37 = vld [vmem:[%s0 + $0x20] sm:$0xff]
    %v38 = vld [vmem:[%s0 + $0x28] sm:$0xff]
    %v39 = vld [vmem:[%s0 + $0x30] sm:$0xff]
    %v40 = vld [vmem:[%s0 + $0x38] sm:$0xff]
    %v41 = vld [vmem:[%s1] sm:$0xff]
    %v42 = vld [vmem:[%s1 + $0x8] sm:$0xff]
    %v43 = vld [vmem:[%s1 + $0x10] sm:$0xff]
    %v44 = vld [vmem:[%s1 + $0x18] sm:$0xff]
    %vm45 = vcmask 261120
    %v47 = vsel %vm45, %v33, 0
    %v50 = vsel %vm45, %v34, 0
    %v53 = vsel %vm45, %v35, 0
    %v56 = vsel %vm45, %v36, 0
    %v59 = vsel %vm45, %v37, 0
    %v62 = vsel %vm45, %v38, 0
    %v65 = vsel %vm45, %v39, 0
    %v68 = vsel %vm45, %v40, 0
    %70 = vmatpush.msra.mxu0 0.0
    %71 = vmatpush.msra.mxu0 0.0
    %72 = vmatpush.msra.mxu0 0.0
    %73 = vmatpush.msra.mxu0 0.0
    %74 = vmatpush.msra.mxu0 0.0
    %75 = vmatpush.msra.mxu0 0.0
    %76 = vmatpush.msra.mxu0 0.0
    %77 = vmatpush.msra.mxu0 0.0
    %78 = vmatpush.msra.mxu0 0.0
    %79 = vmatpush.msra.mxu0 0.0
    %80 = vmatpush.msra.mxu0 0.0
    %81 = vmatpush.msra.mxu0 0.0
    %82 = vmatpush.msra.mxu0 %v44
    %83 = vmatpush.msra.mxu0 %v43
    %84 = vmatpush.msra.mxu0 %v42
    %85 = vmatpush.msra.mxu0 %v41
    %86 = vmatmul.f32.gmra.mxu0 %v47
    %v87 = vpop.f32.mrf.mxu0
    %v88 = vadd.f32 0.0, %v87
    %89 = vmatmul.f32.gmra.mxu0 %v50
    %v90 = vpop.f32.mrf.mxu0
    %v91 = vadd.f32 0.0, %v90
    %92 = vmatmul.f32.gmra.mxu0 %v53
    %v93 = vpop.f32.mrf.mxu0
    %v94 = vadd.f32 0.0, %v93
    %95 = vmatmul.f32.gmra.mxu0 %v56
    %v96 = vpop.f32.mrf.mxu0
    %v97 = vadd.f32 0.0, %v96
    %98 = vmatmul.f32.gmra.mxu0 %v59
    %v99 = vpop.f32.mrf.mxu0
    %v100 = vadd.f32 0.0, %v99
    %101 = vmatmul.f32.gmra.mxu0 %v62
    %v102 = vpop.f32.mrf.mxu0
    %v103 = vadd.f32 0.0, %v102
    %104 = vmatmul.f32.gmra.mxu0 %v65
    %v105 = vpop.f32.mrf.mxu0
    %v106 = vadd.f32 0.0, %v105
    %107 = vmatmul.f32.gmra.mxu0 %v68
    %v108 = vpop.f32.mrf.mxu0
    %v109 = vadd.f32 0.0, %v108
    %110 = vdwg.mxu0
    %v111 = vadd.f32 %v25, %v88
    %v112 = vadd.f32 %v26, %v91
    %v113 = vadd.f32 %v27, %v94
    %v114 = vadd.f32 %v28, %v97
    %v115 = vadd.f32 %v29, %v100
    %v116 = vadd.f32 %v30, %v103
    %v117 = vadd.f32 %v31, %v106
    %v118 = vadd.f32 %v32, %v109
    %vm119 = vcmask 523264
    %120 = vst.msk [vmem:[#allocation2] sm:$0xff] %vm119, %v111
    %121 = vst.msk [vmem:[#allocation2 + $0x8] sm:$0xff] %vm119, %v112
    %122 = vst.msk [vmem:[#allocation2 + $0x10] sm:$0xff] %vm119, %v113
    %123 = vst.msk [vmem:[#allocation2 + $0x18] sm:$0xff] %vm119, %v114
    %124 = vst.msk [vmem:[#allocation2 + $0x20] sm:$0xff] %vm119, %v115
    %125 = vst.msk [vmem:[#allocation2 + $0x28] sm:$0xff] %vm119, %v116
    %126 = vst.msk [vmem:[#allocation2 + $0x30] sm:$0xff] %vm119, %v117
    %127 = vst.msk [vmem:[#allocation2 + $0x38] sm:$0xff] %vm119, %v118
    // Predicated region
    $region14: #{tpu_custom_call.1} parent=1 // pred_check
      %p128 = pneg %p12
    $region15: #{tpu_custom_call.1} parent=1 // pred_check_branch
      %130 = sbr.rel (%p128) target = $region17
    $region16: #{tpu_custom_call.1} parent=1 // pred_region
      %v131 = vld [vmem:[#allocation2] sm:$0xff]
      %v132 = vld [vmem:[#allocation2 + $0x8] sm:$0xff]
      %v133 = vld [vmem:[#allocation2 + $0x10] sm:$0xff]
      %v134 = vld [vmem:[#allocation2 + $0x18] sm:$0xff]
      %v135 = vld [vmem:[#allocation2 + $0x20] sm:$0xff]
      %v136 = vld [vmem:[#allocation2 + $0x28] sm:$0xff]
      %v137 = vld [vmem:[#allocation2 + $0x30] sm:$0xff]
      %v138 = vld [vmem:[#allocation2 + $0x38] sm:$0xff]
      %139 = vst.msk [vmem:[#allocation3] sm:$0xff] %vm119, %v131
      %140 = vst.msk [vmem:[#allocation3 + $0x8] sm:$0xff] %vm119, %v132
      %141 = vst.msk [vmem:[#allocation3 + $0x10] sm:$0xff] %vm119, %v133
      %142 = vst.msk [vmem:[#allocation3 + $0x18] sm:$0xff] %vm119, %v134
      %143 = vst.msk [vmem:[#allocation3 + $0x20] sm:$0xff] %vm119, %v135
      %144 = vst.msk [vmem:[#allocation3 + $0x28] sm:$0xff] %vm119, %v136
      %145 = vst.msk [vmem:[#allocation3 + $0x30] sm:$0xff] %vm119, %v137
      %146 = vst.msk [vmem:[#allocation3 + $0x38] sm:$0xff] %vm119, %v138
    $region17: #{tpu_custom_call.1} parent=1 // pred_fallthru
      _
    // Predicated region
    $region18: #{tpu_custom_call.1} parent=1 // pred_check
      _
    $region19: #{tpu_custom_call.1} parent=1 // pred_check_branch
      %148 = sbr.rel (0) target = $region21
    $region20: #{tpu_custom_call.1} parent=1 // pred_region
      %150 = vsyncadd [#allocation4], 0
      %s151 = sshll.u32 [#allocation3], 4
      %s152 = int_to_ptr.vmem [resolvable:$true] %s151
      %s153 = sshll.u32 %s2, 4
      %s154 = int_to_ptr.hbm [resolvable:$true] %s153
      %159 = dma.vmem_to_hbm [thread:$0]  %s152, 1024, %s154, [#allocation4], 128, 128, 8
    $region21: #{tpu_custom_call.1} parent=1 // pred_fallthru
      _
    // Predicated region
    $region22: #{tpu_custom_call.1} parent=1 // pred_check
      _
    $region23: #{tpu_custom_call.1} parent=1 // pred_check_branch
      %161 = sbr.rel (0) target = $region25
    $region24: #{tpu_custom_call.1} parent=1 // pred_region
      %163 = dma.done [#allocation4], 1024
    $region25: #{tpu_custom_call.1} parent=1 // pred_fallthru
      _
    %164 = vsyncpa [#allocation4], 1

</llo_original>
